<compile_context>
chip_gen: v5e
topology: v5e:2x2
jax: 0.10.0
libtpu: 0.0.40
codegen_flags: <defaults>
</compile_context>

<pallas_src>
import functools

import jax
import jax.numpy as jnp
from jax.experimental import pallas as pl
from jax.experimental.pallas import tpu as pltpu


def _regression_kernel(x_ref, w_ref, b_ref, o_ref, *, apply_sigmoid):
    # x_ref : (TILE_B, D)   VMEM (streamed, double-buffered)
    # w_ref : (OUT, D)      VMEM (resident, lane-dense; constant index map)
    # b_ref : (1, OUT)      VMEM (resident)
    # o_ref : (TILE_B, OUT) VMEM
    y = jax.lax.dot_general(
        x_ref[...], w_ref[...],
        dimension_numbers=(((1,), (1,)), ((), ())),   # contract D of both (x @ W.T)
        preferred_element_type=jnp.float32,
    )
    y = y + b_ref[...].astype(jnp.float32)
    if apply_sigmoid:
        y = jax.nn.sigmoid(y)
    o_ref[...] = y.astype(o_ref.dtype)


def _round_up(x, m):
    return ((x + m - 1) // m) * m


def _vmem_budgets():
    """Return (per-buffer tile budget bytes, vmem_limit_bytes) by TPU generation."""
    cap = 64 * 1024 * 1024  # conservative default (v7x-class VMEM)
    try:
        info = pltpu.get_tpu_info()
        cap = int(getattr(info, "vmem_capacity_bytes", cap) or cap)
    except Exception:
        pass
    if cap > 64 * 1024 * 1024:
        # v5e / v6e: 128 MiB physical VMEM — big tiles, raised scoped limit.
        return 24 * 1024 * 1024, 96 * 1024 * 1024
    # v7x-class: 64 MiB VMEM — keep tiles bounded, limit <= 48 MiB.
    return 8 * 1024 * 1024, 48 * 1024 * 1024


def _pick_tile_b(batch, feature_dim, out_dim, x_itemsize, tile_budget_bytes):
    """Largest batch tile (multiple of 8, no artificial cap) whose x tile plus the
    lane-padded f32 output tile fit within the per-buffer VMEM budget."""
    x_row = _round_up(max(feature_dim, 1), 128) * x_itemsize   # lane-padded x row
    o_row = _round_up(max(out_dim, 1), 128) * 4                # lane-padded f32 out row
    tile_b = tile_budget_bytes // max(1, x_row + o_row)
    tile_b = max(8, (tile_b // 8) * 8)
    if batch <= tile_b:
        # Full-extent block: allowed even if batch is not a multiple of 8.
        return batch
    return tile_b


def regression_forward(x, weight, bias, alg_type,
                       compute_dtype=jnp.bfloat16, tile_budget_bytes=None):
    """Pallas equivalent of Regression.forward.

    x      : (B, D)   float32
    weight : (OUT, D) float32   (PyTorch nn.Linear layout, used lane-dense as-is)
    bias   : (OUT,)   float32
    compute_dtype : dtype of the x/W HBM stream and MXU matmul (default bf16);
                    accumulation, bias add and sigmoid are always float32.
                    Pass jnp.float32 for exact parity with the PyTorch reference.
    tile_budget_bytes : optional override of the per-buffer tile budget (testing).
    """
    assert alg_type in ("LogisticRegression", "LinearRegression")
    apply_sigmoid = alg_type == "LogisticRegression"

    B, D = x.shape
    OUT = weight.shape[0]

    stream_dtype = jnp.dtype(compute_dtype) if compute_dtype is not None else x.dtype
    x_in = x.astype(stream_dtype)
    w_in = weight.astype(stream_dtype)              # native (OUT, D), lane-dense
    b2 = bias.reshape(1, OUT).astype(jnp.float32)

    auto_budget, vmem_limit = _vmem_budgets()
    budget = tile_budget_bytes if tile_budget_bytes is not None else auto_budget
    tile_b = _pick_tile_b(B, D, OUT, stream_dtype.itemsize, budget)
    grid = (pl.cdiv(B, tile_b),)

    kernel = functools.partial(_regression_kernel, apply_sigmoid=apply_sigmoid)

    itemsize = stream_dtype.itemsize
    cost = pl.CostEstimate(
        flops=2 * B * D * OUT,
        transcendentals=(B * OUT) if apply_sigmoid else 0,
        bytes_accessed=B * D * itemsize + OUT * D * itemsize + B * OUT * 4,
    )

    out = pl.pallas_call(
        kernel,
        out_shape=jax.ShapeDtypeStruct((B, OUT), jnp.float32),
        grid=grid,
        in_specs=[
            pl.BlockSpec((tile_b, D), lambda i: (i, 0)),   # streamed x batch tiles
            pl.BlockSpec((OUT, D), lambda i: (0, 0)),      # resident lane-dense weight
            pl.BlockSpec((1, OUT), lambda i: (0, 0)),      # resident bias
        ],
        out_specs=pl.BlockSpec((tile_b, OUT), lambda i: (i, 0)),
        compiler_params=pltpu.CompilerParams(
            dimension_semantics=("parallel",),
            vmem_limit_bytes=vmem_limit,
        ),
        cost_estimate=cost,
    )(x_in, w_in, b2)
    return out


def _init_linear_params(key, out_dim, in_dim):
    # Deterministic init matching nn.Linear's shapes (values are synthetic):
    # weight: (out_dim, in_dim), bias: (out_dim,), uniform(-1/sqrt(in), 1/sqrt(in)).
    kw, kb = jax.random.split(key)
    bound = 1.0 / jnp.sqrt(jnp.float32(in_dim))
    w = jax.random.uniform(kw, (out_dim, in_dim), jnp.float32, -bound, bound)
    b = jax.random.uniform(kb, (out_dim,), jnp.float32, -bound, bound)
    return w, b


if __name__ == "__main__":
    key = jax.random.PRNGKey(0)
    k_x, k_log, k_lin, k_big = jax.random.split(key, 4)

    # --- small shapes matching the module's toy usage ---
    B, D = 8, 32
    x = jax.random.normal(k_x, (B, D), jnp.float32)

    w_log, b_log = _init_linear_params(k_log, 2, D)    # LogisticRegression: Linear(D, 2)
    w_lin, b_lin = _init_linear_params(k_lin, 1, D)    # LinearRegression:  Linear(D, 1)

    ref_log = jax.nn.sigmoid(x @ w_log.T + b_log)
    ref_lin = x @ w_lin.T + b_lin

    # Exact-parity mode (f32 stream).
    y_log = jax.block_until_ready(
        regression_forward(x, w_log, b_log, "LogisticRegression",
                           compute_dtype=jnp.float32))
    y_lin = jax.block_until_ready(
        regression_forward(x, w_lin, b_lin, "LinearRegression",
                           compute_dtype=jnp.float32))
    assert y_log.shape == (B, 2) and y_lin.shape == (B, 1)
    assert jnp.allclose(y_log, ref_log, atol=1e-5, rtol=1e-5)
    assert jnp.allclose(y_lin, ref_lin, atol=1e-5, rtol=1e-5)

    # Default fast path (bf16 x/W stream, f32 accumulate/epilogue): looser tolerance.
    y_log_bf = jax.block_until_ready(
        regression_forward(x, w_log, b_log, "LogisticRegression"))
    y_lin_bf = jax.block_until_ready(
        regression_forward(x, w_lin, b_lin, "LinearRegression"))
    assert jnp.allclose(y_log_bf, ref_log, atol=2e-2, rtol=2e-2)
    assert jnp.allclose(y_lin_bf, ref_lin, atol=5e-2, rtol=5e-2)

    # --- larger batch (non-divisible B), single big tile under the auto budget ---
    Bb, Db = 1029, 256
    xb = jax.random.normal(k_big, (Bb, Db), jnp.float32)
    wb, bb = _init_linear_params(k_log, 2, Db)
    refb = jax.nn.sigmoid(xb @ wb.T + bb)

    yb = jax.block_until_ready(
        regression_forward(xb, wb, bb, "LogisticRegression",
                           compute_dtype=jnp.float32))
    assert yb.shape == (Bb, 2)
    assert jnp.allclose(yb, refb, atol=1e-5, rtol=1e-5)

    yb_bf = jax.block_until_ready(
        regression_forward(xb, wb, bb, "LogisticRegression"))
    assert jnp.allclose(yb_bf, refb, atol=2e-2, rtol=2e-2)

    # --- force a small tile budget to exercise grid > 1 with a partial final tile ---
    yb_tiled = jax.block_until_ready(
        regression_forward(xb, wb, bb, "LogisticRegression",
                           compute_dtype=jnp.float32,
                           tile_budget_bytes=64 * 1024))
    assert jnp.allclose(yb_tiled, refb, atol=1e-5, rtol=1e-5)

    print("KERNEL_OK")
</pallas_src>

<mosaic_0001>
module attributes {stable_mosaic.version = 11 : i64} {
  func.func @_regression_kernel(%arg0: i32, %arg1: memref<8x32xf32, #tpu.memory_space<vmem>>, %arg2: memref<2x32xf32, #tpu.memory_space<vmem>>, %arg3: memref<1x2xf32, #tpu.memory_space<vmem>>, %arg4: memref<8x2xf32, #tpu.memory_space<vmem>>) attributes {dimension_semantics = [#tpu.dimension_semantics<parallel>], iteration_bounds = array<i64: 1>, scalar_prefetch = 0 : i64, scratch_operands = 0 : i64, tpu.core_type = #tpu.core_type<tc>, window_params = [{transform_indices = @transform_0, window_bounds = array<i64: 8, 32>}, {pipeline_mode = #tpu.pipeline_mode<synchronous>, transform_indices = @transform_1, window_bounds = array<i64: 2, 32>}, {pipeline_mode = #tpu.pipeline_mode<synchronous>, transform_indices = @transform_2, window_bounds = array<i64: 1, 2>}, {transform_indices = @transform_3, window_bounds = array<i64: 8, 2>}]} {
    %c0 = arith.constant 0 : index
    %c0_0 = arith.constant 0 : index
    %0 = vector.load %arg1[%c0, %c0_0] : memref<8x32xf32, #tpu.memory_space<vmem>>, vector<8x32xf32>
    %c0_1 = arith.constant 0 : index
    %c0_2 = arith.constant 0 : index
    %1 = vector.load %arg2[%c0_1, %c0_2] : memref<2x32xf32, #tpu.memory_space<vmem>>, vector<2x32xf32>
    %cst = arith.constant dense<0.000000e+00> : vector<8x2xf32>
    %2 = tpu.matmul %0, %1, %cst {dimension_numbers = #tpu.dot_dimension_numbers<[1], [1], [0], [0], [0, 0, 1, 0], [], []>} : vector<8x32xf32>, vector<2x32xf32>, vector<8x2xf32> -> vector<8x2xf32>
    %c0_3 = arith.constant 0 : index
    %c0_4 = arith.constant 0 : index
    %3 = vector.load %arg3[%c0_3, %c0_4] : memref<1x2xf32, #tpu.memory_space<vmem>>, vector<1x2xf32>
    %4 = vector.broadcast %3 : vector<1x2xf32> to vector<8x2xf32>
    %5 = arith.addf %2, %4 : vector<8x2xf32>
    %6 = arith.negf %5 : vector<8x2xf32>
    %7 = math.exp %6 : vector<8x2xf32>
    %cst_5 = arith.constant 1.000000e+00 : f32
    %8 = vector.broadcast %cst_5 : f32 to vector<8x2xf32>
    %9 = arith.addf %8, %7 : vector<8x2xf32>
    %10 = arith.divf %8, %9 : vector<8x2xf32>
    %c0_6 = arith.constant 0 : index
    %c0_7 = arith.constant 0 : index
    %11 = vector.load %arg4[%c0_6, %c0_7] : memref<8x2xf32, #tpu.memory_space<vmem>>, vector<8x2xf32>
    tpu.vector_store %arg4[%c0_6, %c0_7], %10 {strides = array<i32>} : memref<8x2xf32, #tpu.memory_space<vmem>>, vector<8x2xf32>,
    return
  }
  func.func @transform_0(%arg0: i32) -> (i32, i32) {
    %c0_i32 = arith.constant 0 : i32
    %c0_i32_0 = arith.constant 0 : i32
    return %arg0, %c0_i32 : i32, i32
  }
  func.func @transform_1(%arg0: i32) -> (i32, i32) {
    %c0_i32 = arith.constant 0 : i32
    %c0_i32_0 = arith.constant 0 : i32
    %c0_i32_1 = arith.constant 0 : i32
    return %c0_i32, %c0_i32_0 : i32, i32
  }
  func.func @transform_2(%arg0: i32) -> (i32, i32) {
    %c0_i32 = arith.constant 0 : i32
    %c0_i32_0 = arith.constant 0 : i32
    %c0_i32_1 = arith.constant 0 : i32
    return %c0_i32, %c0_i32_0 : i32, i32
  }
  func.func @transform_3(%arg0: i32) -> (i32, i32) {
    %c0_i32 = arith.constant 0 : i32
    %c0_i32_0 = arith.constant 0 : i32
    return %arg0, %c0_i32 : i32, i32
  }
}

</mosaic_0001>

<llo_original>
// kernel: tpu_custom_call.1
$region0: #{tpu_custom_call.1}
  #allocation0 [shape = 'u32[]', space=smem, size = 0x4, offset = 0x4, fixed_abs, tag = 'smem constant byte address 0x4 - core index']
  #allocation1 [shape = 'u32[72,128]{1,0:T(1,128)}', space=vmem, size = 0x9000, scoped, tag = 'internal scratch']
  %s0 = inlined_call_operand.hbm [shape: f32[8,32], index: 0, kind: input, shape index: {}]
  %s1 = inlined_call_operand.hbm [shape: f32[2,32], index: 1, kind: input, shape index: {}]
  %s2 = inlined_call_operand.vmem [shape: f32[1,2], index: 2, kind: input, shape index: {}]
  %s3 = inlined_call_operand.vmem [shape: f32[8,2], index: 3, kind: output, shape index: {}]
  %s4 = sld [smem:[#allocation0]]
  $region30: #{tpu_custom_call.1} parent=0
    _
  %s6 = ssub.s32 1, %s4
  %s7 = scalar_select 0, %s6, %s4
  $region1: #{tpu_custom_call.1} parent=0
    #allocation2 [shape = 'u8[4096]{0}', space=vmem, size = 0x1000, scoped, tag = 'input window, operand 0, single buffered']
    #allocation3 [shape = 's32[1]{0}', space=sflag, size = 0x4, scoped, tag = 'scoped memory for tpu_custom_call.1']
    #allocation4 [shape = 'u8[1024]{0}', space=vmem, size = 0x400, scoped, tag = 'input window, operand 1, single buffered']
    #allocation5 [shape = 's32[1]{0}', space=sflag, size = 0x4, scoped, tag = 'scoped memory for tpu_custom_call.1']
    %8 = vsyncpa [#allocation3], 0
    %9 = vsyncpa [#allocation5], 0
    // Predicated region
    $region2: #{tpu_custom_call.1} parent=1 // pred_check
      _
    $region3: #{tpu_custom_call.1} parent=1 // pred_check_branch
      %11 = sbr.rel (0) target = $region5
    $region4: #{tpu_custom_call.1} parent=1 // pred_region
      %13 = vsyncadd [#allocation3], 0
      %s15 = sshll.u32 %s0, 4
      %s16 = int_to_ptr.hbm [resolvable:$true] %s15
      %s17 = sshll.u32 [#allocation2], 4
      %s18 = int_to_ptr.vmem [resolvable:$true] %s17
      %20 = dma.hbm_to_vmem [thread:$0]  %s16, 128, %s18, [#allocation3]
    $region5: #{tpu_custom_call.1} parent=1 // pred_fallthru
      _
    // Predicated region
    $region6: #{tpu_custom_call.1} parent=1 // pred_check
      _
    $region7: #{tpu_custom_call.1} parent=1 // pred_check_branch
      %22 = sbr.rel (0) target = $region9
    $region8: #{tpu_custom_call.1} parent=1 // pred_region
      %24 = vsyncadd [#allocation5], 0
      %s26 = sshll.u32 %s1, 4
      %s27 = int_to_ptr.hbm [resolvable:$true] %s26
      %s28 = sshll.u32 [#allocation4], 4
      %s29 = int_to_ptr.vmem [resolvable:$true] %s28
      %31 = dma.hbm_to_vmem [thread:$0]  %s27, 32, %s29, [#allocation5]
    $region9: #{tpu_custom_call.1} parent=1 // pred_fallthru
      _
    // Predicated region
    $region10: #{tpu_custom_call.1} parent=1 // pred_check
      _
    $region11: #{tpu_custom_call.1} parent=1 // pred_check_branch
      %33 = sbr.rel (0) target = $region13
    $region12: #{tpu_custom_call.1} parent=1 // pred_region
      _
    $region13: #{tpu_custom_call.1} parent=1 // pred_fallthru
      _
    // Predicated region
    $region14: #{tpu_custom_call.1} parent=1 // pred_check
      _
    $region15: #{tpu_custom_call.1} parent=1 // pred_check_branch
      %35 = sbr.rel (0) target = $region17
    $region16: #{tpu_custom_call.1} parent=1 // pred_region
      %37 = dma.done [#allocation3], 128
    $region17: #{tpu_custom_call.1} parent=1 // pred_fallthru
      _
    // Predicated region
    $region18: #{tpu_custom_call.1} parent=1 // pred_check
      _
    $region19: #{tpu_custom_call.1} parent=1 // pred_check_branch
      %39 = sbr.rel (0) target = $region21
    $region20: #{tpu_custom_call.1} parent=1 // pred_region
      %41 = dma.done [#allocation5], 32
    $region21: #{tpu_custom_call.1} parent=1 // pred_fallthru
      _
    %v42 = vld [vmem:[#allocation2] sm:$0xff]
    %v43 = vld [vmem:[#allocation4] sm:$0x3]
    %v44 = vld [vmem:[%s2] sm:$0x1]
    %v46 = vperm.slane %v44, 0
    %vm48 = vcmask 261120
    %v50 = vsel %vm48, %v42, 0
    %v53 = vsel %vm48, %v43, 0
    %55 = vmatpush.xpose.msra.mxu0 0.0
    %56 = vmatpush.xpose.msra.mxu0 0.0
    %57 = vmatpush.xpose.msra.mxu0 0.0
    %58 = vmatpush.xpose.msra.mxu0 0.0
    %59 = vmatpush.xpose.msra.mxu0 0.0
    %60 = vmatpush.xpose.msra.mxu0 0.0
    %61 = vmatpush.xpose.msra.mxu0 0.0
    %62 = vmatpush.xpose.msra.mxu0 0.0
    %63 = vmatpush.xpose.msra.mxu0 0.0
    %64 = vmatpush.xpose.msra.mxu0 0.0
    %65 = vmatpush.xpose.msra.mxu0 0.0
    %66 = vmatpush.xpose.msra.mxu0 0.0
    %67 = vmatpush.xpose.msra.mxu0 0.0
    %68 = vmatpush.xpose.msra.mxu0 0.0
    %69 = vmatpush.xpose.msra.mxu0 0.0
    %70 = vmatpush.xpose.msra.mxu0 %v53
    %71 = vmatmul.f32.gmra.mxu0 %v50
    %v72 = vpop.f32.mrf.mxu0
    %v73 = vadd.f32 %v46, %v72
    %74 = vdwg.mxu0
    %v75 = vxor.u32 %v73, 2147483648
    %v76 = vmul.f32 %v75, 1.442695
    %v77 = vpow.pop %v76
    %v78 = vadd.f32 %v77, 1.0
    %v79 = vrcp.pop %v78
    %v80 = vmul.f32 %v78, %v79
    %v81 = vsub.f32 1.0, %v80
    %v82 = vmul.f32 %v79, %v81
    %v83 = vadd.f32 %v79, %v82
    %vm84 = vweird.f32 %v78
    %vm85 = vweird.f32 %v79
    %vm86 = vmor %vm84, %vm85
    %v87 = vsel %vm86, %v79, %v83
    %v88 = vand.u32 2147483647, %v78
    %vm89 = vcmp.eq.f32.partialorder %v88, 8.507059e+37
    %v90 = vand.u32 %v78, 2147483648
    %v91 = vor.u32 1.1754944e-38, %v90
    %v92 = vsel %vm89, %v91, %v87
    %v93 = vmul.f32 1.0, %v92
    %vm94 = vcmask 15360
    %95 = vst.msk [vmem:[%s3] sm:$0xff] %vm94, %v93
    // Predicated region
    $region22: #{tpu_custom_call.1} parent=1 // pred_check
      _
    $region23: #{tpu_custom_call.1} parent=1 // pred_check_branch
      %97 = sbr.rel (0) target = $region25
    $region24: #{tpu_custom_call.1} parent=1 // pred_region
      _
    $region25: #{tpu_custom_call.1} parent=1 // pred_fallthru
      _
    // Predicated region
    $region26: #{tpu_custom_call.1} parent=1 // pred_check
      _
    $region27: #{tpu_custom_call.1} parent=1 // pred_check_branch
      %99 = sbr.rel (0) target = $region29
    $region28: #{tpu_custom_call.1} parent=1 // pred_region
      _
    $region29: #{tpu_custom_call.1} parent=1 // pred_fallthru
      _
    %100 = vsyncpa [#allocation3], 1
    %101 = vsyncpa [#allocation5], 1

</llo_original>
